<compile_context>
chip_gen: v7x
topology: tpu7x:2x2x1
jax: 0.10.0
libtpu: 0.0.40
codegen_flags: <defaults>
</compile_context>

<pallas_src>
import functools
import math

import jax
import jax.numpy as jnp
from jax.experimental import pallas as pl
from jax.experimental.pallas import tpu as pltpu


def _round_up(x, m):
    return (x + m - 1) // m * m


def _cdiv(a, b):
    return (a + b - 1) // b


def _choose_row_tile(m, tm_hint):
    """Row-tile size: no over-padding for small M, >=2 tiles for large M."""
    m8 = _round_up(max(m, 1), 8)
    if m8 <= 128:
        return m8  # single small tile, block == full (padded) M extent
    # At least two lane/sublane-aligned tiles so "parallel" shards across the
    # two TensorCores on v7x (harmless on v5e/v6e).
    return min(tm_hint, _round_up(_cdiv(m8, 2), 128))


def _fused_mlp_kernel(*refs, num_layers):
    # refs = (x_ref, w_0..w_{L-1}, b_0..b_{L-1}, o_ref)
    # x_ref: (tm, Din0_pad) bf16
    # w_l  : (Din_pad_l, Dout_pad_l) bf16          (padded, resident in VMEM)
    # b_l  : (1, Dout_pad_l) f32
    # o_ref: (tm, Dout_pad_{L-1}) out dtype
    x_ref = refs[0]
    w_refs = refs[1:1 + num_layers]
    b_refs = refs[1 + num_layers:1 + 2 * num_layers]
    o_ref = refs[1 + 2 * num_layers]

    y = x_ref[...]                                   # bf16
    for l in range(num_layers):                      # static unroll, stays in VMEM/vregs
        acc = jnp.dot(y.astype(jnp.bfloat16), w_refs[l][...],
                      preferred_element_type=jnp.float32)   # bf16 MXU, f32 accum
        acc = acc + b_refs[l][...]                   # (1, Dout_pad) broadcast, f32
        if l < num_layers - 1:
            acc = jnp.maximum(acc, 0.0)
        y = acc
    o_ref[...] = y.astype(o_ref.dtype)


@functools.partial(jax.jit, static_argnames=("out_dim", "tm"))
def _mlp_forward_2d(x2d, w_pad, b_pad, *, out_dim, tm=512):
    """x2d: (M, in_dim). w_pad: tuple of (Din_pad_l, Dout_pad_l) bf16.
    b_pad: tuple of (1, Dout_pad_l) f32."""
    M, in_dim = x2d.shape
    L = len(w_pad)
    din0_pad = w_pad[0].shape[0]
    dout_last_pad = w_pad[-1].shape[1]
    out_dtype = x2d.dtype
    out_itemsize = jnp.dtype(out_dtype).itemsize

    tm_eff = _choose_row_tile(M, tm)
    m_pad = _round_up(max(M, 1), tm_eff)

    # Zero padding keeps the math exact (padded rows/cols/biases are zero).
    xp = x2d.astype(jnp.bfloat16)
    if (m_pad, din0_pad) != (M, in_dim):
        xp = jnp.pad(xp, ((0, m_pad - M), (0, din0_pad - in_dim)))

    # --- VMEM budget (sized for v7x's 64 MiB physical VMEM) ----------------
    w_bytes = sum(int(w.size) * w.dtype.itemsize for w in w_pad)
    b_bytes = sum(int(b.size) * b.dtype.itemsize for b in b_pad)
    dmax = max([din0_pad] + [w.shape[1] for w in w_pad])
    est = (2 * (w_bytes + b_bytes)            # weights/biases (assume double-buffered)
           + 2 * tm_eff * din0_pad * 2        # x tile, bf16, double-buffered
           + 2 * tm_eff * dout_last_pad * out_itemsize   # output tile, double-buffered
           + tm_eff * dmax * 4)               # live f32 activation
    if est > 48 * 2**20:
        # TODO(synk): fall back to splitting the layer stack across multiple
        # pallas_calls (or tiling N) instead of failing.
        raise ValueError(f"fused MLP VMEM estimate {est} B exceeds 48 MiB budget")
    vmem_limit = int(min(max(2 * est, 32 * 2**20), 56 * 2**20))

    # --- Specs --------------------------------------------------------------
    in_specs = [pl.BlockSpec((tm_eff, din0_pad), lambda i: (i, 0))]  # x tile
    for w in w_pad:   # whole (padded) weight, constant index_map -> fetched once
        in_specs.append(pl.BlockSpec(w.shape, lambda i: (0, 0)))
    for b in b_pad:
        in_specs.append(pl.BlockSpec(b.shape, lambda i: (0, 0)))

    flops = 2 * m_pad * sum(w.shape[0] * w.shape[1] for w in w_pad)
    bytes_accessed = (int(xp.size) * 2 + w_bytes + b_bytes
                      + m_pad * dout_last_pad * out_itemsize)

    kernel = functools.partial(_fused_mlp_kernel, num_layers=L)
    out = pl.pallas_call(
        kernel,
        out_shape=jax.ShapeDtypeStruct((m_pad, dout_last_pad), out_dtype),
        grid_spec=pl.GridSpec(
            grid=(m_pad // tm_eff,),
            in_specs=in_specs,
            out_specs=pl.BlockSpec((tm_eff, dout_last_pad), lambda i: (i, 0)),
        ),
        compiler_params=pltpu.CompilerParams(
            dimension_semantics=("parallel",),    # shard M tiles across TCs on v7x
            vmem_limit_bytes=vmem_limit,
        ),
        cost_estimate=pl.CostEstimate(
            flops=int(flops),
            transcendentals=0,
            bytes_accessed=int(bytes_accessed),
        ),
    )(xp, *w_pad, *b_pad)

    return out[:M, :out_dim]


class MLPPallas:
    """Pallas equivalent of the PyTorch MLP module (fully fused forward)."""

    def __init__(self, input_dim, hidden_dim, output_dim, num_layers, key):
        self.num_layers = num_layers
        self.output_dim = output_dim
        h = [hidden_dim] * (num_layers - 1)
        dims_in = [input_dim] + h
        dims_out = h + [output_dim]

        self.weights = []  # unpadded f32, stored as (in, out) for x @ W
        self.biases = []
        for n, k in zip(dims_in, dims_out):
            key, kw, kb = jax.random.split(key, 3)
            # Mimic PyTorch's uniform(-1/sqrt(fan_in), 1/sqrt(fan_in)) init.
            bound = 1.0 / math.sqrt(n)
            w = jax.random.uniform(kw, (n, k), jnp.float32, -bound, bound)
            b = jax.random.uniform(kb, (k,), jnp.float32, -bound, bound)
            self.weights.append(w)
            self.biases.append(b)

        # Per-layer lane-aligned padding (no uniform square): layer l gets
        # (round_up(in_l,128), round_up(out_l,128)); consecutive layers agree
        # because out_l == in_{l+1}.  Weights stored bf16 (halves DMA bytes and
        # feeds the bf16 MXU); biases stay f32 (added after the f32 accum).
        w_pad, b_pad = [], []
        for w, b in zip(self.weights, self.biases):
            dip = _round_up(w.shape[0], 128)
            dop = _round_up(w.shape[1], 128)
            wp = (jnp.zeros((dip, dop), jnp.bfloat16)
                  .at[:w.shape[0], :w.shape[1]].set(w.astype(jnp.bfloat16)))
            bp = jnp.zeros((1, dop), jnp.float32).at[:, :b.shape[0]].set(b)
            w_pad.append(wp)
            b_pad.append(bp)
        self.w_pad = tuple(w_pad)
        self.b_pad = tuple(b_pad)

    def __call__(self, x, *, tm=512):
        orig_shape = x.shape
        x2d = x.reshape(-1, orig_shape[-1])
        out2d = _mlp_forward_2d(x2d, self.w_pad, self.b_pad,
                                out_dim=self.output_dim, tm=tm)
        return out2d.reshape(orig_shape[:-1] + (self.output_dim,))


def _reference_mlp(mlp, x, *, bf16_operands):
    """Plain-JAX reference; bf16_operands mirrors the kernel's MXU precision."""
    orig_shape = x.shape
    y = x.reshape(-1, orig_shape[-1])
    for i, (w, b) in enumerate(zip(mlp.weights, mlp.biases)):
        if bf16_operands:
            y = jnp.dot(y.astype(jnp.bfloat16), w.astype(jnp.bfloat16),
                        preferred_element_type=jnp.float32) + b
        else:
            y = jnp.dot(y, w, precision=jax.lax.Precision.HIGHEST) + b
        if i < mlp.num_layers - 1:
            y = jnp.maximum(y, 0.0)
    return y.reshape(orig_shape[:-1] + (y.shape[-1],))


if __name__ == "__main__":
    key = jax.random.PRNGKey(0)
    k_param, k_x = jax.random.split(key)

    # Small shapes consistent with how the module is used
    # (e.g. regression branch: MLP(embed_dims, embed_dims, code_size, 3)).
    batch, num_query = 2, 8
    input_dim, hidden_dim, output_dim, num_layers = 32, 32, 16, 3

    mlp = MLPPallas(input_dim, hidden_dim, output_dim, num_layers, k_param)
    x = jax.random.normal(k_x, (batch, num_query, input_dim), jnp.float32)

    out = jax.block_until_ready(mlp(x))
    assert out.shape == (batch, num_query, output_dim), out.shape
    assert out.dtype == x.dtype, out.dtype

    ref_bf16 = _reference_mlp(mlp, x, bf16_operands=True)
    ref_f32 = _reference_mlp(mlp, x, bf16_operands=False)
    # Tight check vs a reference using the same bf16-operand / f32-accum math,
    # loose sanity check vs the full-f32 reference (bf16 rounding drift).
    assert jnp.allclose(out, ref_bf16, atol=1e-3, rtol=1e-3), "mismatch vs bf16 reference"
    assert jnp.allclose(out, ref_f32, atol=5e-2, rtol=5e-2), "drifted too far from f32 reference"

    print("KERNEL_OK")
</pallas_src>

<mosaic_0001>
module attributes {stable_mosaic.version = 11 : i64} {
  func.func @_fused_mlp_kernel(%arg0: i32, %arg1: memref<16x128xbf16, #tpu.memory_space<vmem>>, %arg2: memref<128x128xbf16, #tpu.memory_space<vmem>>, %arg3: memref<128x128xbf16, #tpu.memory_space<vmem>>, %arg4: memref<128x128xbf16, #tpu.memory_space<vmem>>, %arg5: memref<1x128xf32, #tpu.memory_space<vmem>>, %arg6: memref<1x128xf32, #tpu.memory_space<vmem>>, %arg7: memref<1x128xf32, #tpu.memory_space<vmem>>, %arg8: memref<16x128xf32, #tpu.memory_space<vmem>>) attributes {dimension_semantics = [#tpu.dimension_semantics<parallel>], iteration_bounds = array<i64: 1>, scalar_prefetch = 0 : i64, scratch_operands = 0 : i64, tpu.core_type = #tpu.core_type<tc>, window_params = [{transform_indices = @transform_0, window_bounds = array<i64: 16, 128>}, {pipeline_mode = #tpu.pipeline_mode<synchronous>, transform_indices = @transform_1, window_bounds = array<i64: 128, 128>}, {pipeline_mode = #tpu.pipeline_mode<synchronous>, transform_indices = @transform_2, window_bounds = array<i64: 128, 128>}, {pipeline_mode = #tpu.pipeline_mode<synchronous>, transform_indices = @transform_3, window_bounds = array<i64: 128, 128>}, {pipeline_mode = #tpu.pipeline_mode<synchronous>, transform_indices = @transform_4, window_bounds = array<i64: 1, 128>}, {pipeline_mode = #tpu.pipeline_mode<synchronous>, transform_indices = @transform_5, window_bounds = array<i64: 1, 128>}, {pipeline_mode = #tpu.pipeline_mode<synchronous>, transform_indices = @transform_6, window_bounds = array<i64: 1, 128>}, {transform_indices = @transform_7, window_bounds = array<i64: 16, 128>}]} {
    %c0 = arith.constant 0 : index
    %c0_0 = arith.constant 0 : index
    %0 = vector.load %arg1[%c0, %c0_0] : memref<16x128xbf16, #tpu.memory_space<vmem>>, vector<16x128xbf16>
    %c0_1 = arith.constant 0 : index
    %c0_2 = arith.constant 0 : index
    %1 = vector.load %arg2[%c0_1, %c0_2] : memref<128x128xbf16, #tpu.memory_space<vmem>>, vector<128x128xbf16>
    %cst = arith.constant dense<0.000000e+00> : vector<16x128xf32>
    %2 = tpu.matmul %0, %1, %cst {dimension_numbers = #tpu.dot_dimension_numbers<[1], [0], [0], [1], [0, 0, 1, 1], [], []>} : vector<16x128xbf16>, vector<128x128xbf16>, vector<16x128xf32> -> vector<16x128xf32>
    %c0_3 = arith.constant 0 : index
    %c0_4 = arith.constant 0 : index
    %3 = vector.load %arg5[%c0_3, %c0_4] : memref<1x128xf32, #tpu.memory_space<vmem>>, vector<1x128xf32>
    %4 = vector.broadcast %3 : vector<1x128xf32> to vector<16x128xf32>
    %5 = arith.addf %2, %4 : vector<16x128xf32>
    %cst_5 = arith.constant 0.000000e+00 : f32
    %6 = vector.broadcast %cst_5 : f32 to vector<16x128xf32>
    %7 = arith.maximumf %5, %6 : vector<16x128xf32>
    %8 = arith.truncf %7 : vector<16x128xf32> to vector<16x128xbf16>
    %c0_6 = arith.constant 0 : index
    %c0_7 = arith.constant 0 : index
    %9 = vector.load %arg3[%c0_6, %c0_7] : memref<128x128xbf16, #tpu.memory_space<vmem>>, vector<128x128xbf16>
    %cst_8 = arith.constant dense<0.000000e+00> : vector<16x128xf32>
    %10 = tpu.matmul %8, %9, %cst_8 {dimension_numbers = #tpu.dot_dimension_numbers<[1], [0], [0], [1], [0, 0, 1, 1], [], []>} : vector<16x128xbf16>, vector<128x128xbf16>, vector<16x128xf32> -> vector<16x128xf32>
    %c0_9 = arith.constant 0 : index
    %c0_10 = arith.constant 0 : index
    %11 = vector.load %arg6[%c0_9, %c0_10] : memref<1x128xf32, #tpu.memory_space<vmem>>, vector<1x128xf32>
    %12 = vector.broadcast %11 : vector<1x128xf32> to vector<16x128xf32>
    %13 = arith.addf %10, %12 : vector<16x128xf32>
    %cst_11 = arith.constant 0.000000e+00 : f32
    %14 = vector.broadcast %cst_11 : f32 to vector<16x128xf32>
    %15 = arith.maximumf %13, %14 : vector<16x128xf32>
    %16 = arith.truncf %15 : vector<16x128xf32> to vector<16x128xbf16>
    %c0_12 = arith.constant 0 : index
    %c0_13 = arith.constant 0 : index
    %17 = vector.load %arg4[%c0_12, %c0_13] : memref<128x128xbf16, #tpu.memory_space<vmem>>, vector<128x128xbf16>
    %cst_14 = arith.constant dense<0.000000e+00> : vector<16x128xf32>
    %18 = tpu.matmul %16, %17, %cst_14 {dimension_numbers = #tpu.dot_dimension_numbers<[1], [0], [0], [1], [0, 0, 1, 1], [], []>} : vector<16x128xbf16>, vector<128x128xbf16>, vector<16x128xf32> -> vector<16x128xf32>
    %c0_15 = arith.constant 0 : index
    %c0_16 = arith.constant 0 : index
    %19 = vector.load %arg7[%c0_15, %c0_16] : memref<1x128xf32, #tpu.memory_space<vmem>>, vector<1x128xf32>
    %20 = vector.broadcast %19 : vector<1x128xf32> to vector<16x128xf32>
    %21 = arith.addf %18, %20 : vector<16x128xf32>
    %c0_17 = arith.constant 0 : index
    %c0_18 = arith.constant 0 : index
    %22 = vector.load %arg8[%c0_17, %c0_18] : memref<16x128xf32, #tpu.memory_space<vmem>>, vector<16x128xf32>
    tpu.vector_store %arg8[%c0_17, %c0_18], %21 {strides = array<i32>} : memref<16x128xf32, #tpu.memory_space<vmem>>, vector<16x128xf32>,
    return
  }
  func.func @transform_0(%arg0: i32) -> (i32, i32) {
    %c0_i32 = arith.constant 0 : i32
    %c0_i32_0 = arith.constant 0 : i32
    return %arg0, %c0_i32 : i32, i32
  }
  func.func @transform_1(%arg0: i32) -> (i32, i32) {
    %c0_i32 = arith.constant 0 : i32
    %c0_i32_0 = arith.constant 0 : i32
    %c0_i32_1 = arith.constant 0 : i32
    return %c0_i32, %c0_i32_0 : i32, i32
  }
  func.func @transform_2(%arg0: i32) -> (i32, i32) {
    %c0_i32 = arith.constant 0 : i32
    %c0_i32_0 = arith.constant 0 : i32
    %c0_i32_1 = arith.constant 0 : i32
    return %c0_i32, %c0_i32_0 : i32, i32
  }
  func.func @transform_3(%arg0: i32) -> (i32, i32) {
    %c0_i32 = arith.constant 0 : i32
    %c0_i32_0 = arith.constant 0 : i32
    %c0_i32_1 = arith.constant 0 : i32
    return %c0_i32, %c0_i32_0 : i32, i32
  }
  func.func @transform_4(%arg0: i32) -> (i32, i32) {
    %c0_i32 = arith.constant 0 : i32
    %c0_i32_0 = arith.constant 0 : i32
    %c0_i32_1 = arith.constant 0 : i32
    return %c0_i32, %c0_i32_0 : i32, i32
  }
  func.func @transform_5(%arg0: i32) -> (i32, i32) {
    %c0_i32 = arith.constant 0 : i32
    %c0_i32_0 = arith.constant 0 : i32
    %c0_i32_1 = arith.constant 0 : i32
    return %c0_i32, %c0_i32_0 : i32, i32
  }
  func.func @transform_6(%arg0: i32) -> (i32, i32) {
    %c0_i32 = arith.constant 0 : i32
    %c0_i32_0 = arith.constant 0 : i32
    %c0_i32_1 = arith.constant 0 : i32
    return %c0_i32, %c0_i32_0 : i32, i32
  }
  func.func @transform_7(%arg0: i32) -> (i32, i32) {
    %c0_i32 = arith.constant 0 : i32
    %c0_i32_0 = arith.constant 0 : i32
    return %arg0, %c0_i32 : i32, i32
  }
}

</mosaic_0001>

<llo_original>
// kernel: _mlp_forward_2d.1
$region0: #{_mlp_forward_2d.1}
  #allocation0 [shape = 'u32[]', space=smem, size = 0x4, offset = 0x4, fixed_abs, tag = 'smem constant byte address 0x4 - core index']
  #allocation1 [shape = 'u32[144,128]{1,0:T(1,128)}', space=vmem, size = 0x12000, scoped, tag = 'internal scratch']
  %s0 = inlined_call_operand.vmem [shape: bf16[16,128], index: 0, kind: input, shape index: {}]
  %s1 = inlined_call_operand.hbm [shape: bf16[128,128], index: 1, kind: input, shape index: {}]
  %s2 = inlined_call_operand.hbm [shape: bf16[128,128], index: 2, kind: input, shape index: {}]
  %s3 = inlined_call_operand.hbm [shape: bf16[128,128], index: 3, kind: input, shape index: {}]
  %s4 = inlined_call_operand.vmem [shape: f32[1,128], index: 4, kind: input, shape index: {}]
  %s5 = inlined_call_operand.vmem [shape: f32[1,128], index: 5, kind: input, shape index: {}]
  %s6 = inlined_call_operand.vmem [shape: f32[1,128], index: 6, kind: input, shape index: {}]
  %s7 = inlined_call_operand.hbm [shape: f32[16,128], index: 7, kind: output, shape index: {}]
  %s8 = sld [smem:[#allocation0]]
  $region50: #{_mlp_forward_2d.1} parent=0
    _
  %s10 = ssub.s32 1, %s8
  %s11 = scalar_select 0, %s10, %s8
  $region1: #{_mlp_forward_2d.1} parent=0
    #allocation2 [shape = 'u8[32768]{0}', space=vmem, size = 0x8000, scoped, tag = 'input window, operand 1, single buffered']
    #allocation3 [shape = 's32[1]{0}', space=sflag, size = 0x4, scoped, tag = 'scoped memory for _mlp_forward_2d.1']
    #allocation4 [shape = 's32[1]{0}', space=sflag, size = 0x4, scoped, tag = 'scoped memory for _mlp_forward_2d.1']
    #allocation5 [shape = 'u8[32768]{0}', space=vmem, size = 0x8000, scoped, tag = 'input window, operand 2, single buffered']
    #allocation6 [shape = 's32[1]{0}', space=sflag, size = 0x4, scoped, tag = 'scoped memory for _mlp_forward_2d.1']
    #allocation7 [shape = 'u8[32768]{0}', space=vmem, size = 0x8000, scoped, tag = 'input window, operand 3, single buffered']
    #allocation8 [shape = 'u8[8192]{0}', space=vmem, size = 0x2000, scoped, tag = 'output window, operand 0, single buffered']
    %12 = vsyncpa [#allocation3], 0
    %13 = vsyncpa [#allocation6], 0
    %14 = vsyncpa [#allocation4], 0
    // Predicated region
    $region2: #{_mlp_forward_2d.1} parent=1 // pred_check
      _
    $region3: #{_mlp_forward_2d.1} parent=1 // pred_check_branch
      %16 = sbr.rel (0) target = $region5
    $region4: #{_mlp_forward_2d.1} parent=1 // pred_region
      _
    $region5: #{_mlp_forward_2d.1} parent=1 // pred_fallthru
      _
    // Predicated region
    $region6: #{_mlp_forward_2d.1} parent=1 // pred_check
      _
    $region7: #{_mlp_forward_2d.1} parent=1 // pred_check_branch
      %18 = sbr.rel (0) target = $region9
    $region8: #{_mlp_forward_2d.1} parent=1 // pred_region
      %s20 = ssub.s32 1024, 1024
      %21 = vsyncadd [#allocation3], %s20
      %s22 = sshll.u32 [#allocation2], 4
      %s23 = int_to_ptr.vmem [resolvable:$true] %s22
      %28 = dma.hbm_to_vmem [thread:$0]  %s1, 1024, %s23, [#allocation3], 64, 64, 4
    $region9: #{_mlp_forward_2d.1} parent=1 // pred_fallthru
      _
    // Predicated region
    $region10: #{_mlp_forward_2d.1} parent=1 // pred_check
      _
    $region11: #{_mlp_forward_2d.1} parent=1 // pred_check_branch
      %30 = sbr.rel (0) target = $region13
    $region12: #{_mlp_forward_2d.1} parent=1 // pred_region
      %s32 = ssub.s32 1024, 1024
      %33 = vsyncadd [#allocation6], %s32
      %s34 = sshll.u32 [#allocation5], 4
      %s35 = int_to_ptr.vmem [resolvable:$true] %s34
      %40 = dma.hbm_to_vmem [thread:$0]  %s2, 1024, %s35, [#allocation6], 64, 64, 4
    $region13: #{_mlp_forward_2d.1} parent=1 // pred_fallthru
      _
    // Predicated region
    $region14: #{_mlp_forward_2d.1} parent=1 // pred_check
      _
    $region15: #{_mlp_forward_2d.1} parent=1 // pred_check_branch
      %42 = sbr.rel (0) target = $region17
    $region16: #{_mlp_forward_2d.1} parent=1 // pred_region
      %s44 = ssub.s32 1024, 1024
      %45 = vsyncadd [#allocation6], %s44
      %s46 = sshll.u32 [#allocation7], 4
      %s47 = int_to_ptr.vmem [resolvable:$true] %s46
      %52 = dma.hbm_to_vmem [thread:$0]  %s3, 1024, %s47, [#allocation6], 64, 64, 4
    $region17: #{_mlp_forward_2d.1} parent=1 // pred_fallthru
      _
    // Predicated region
    $region18: #{_mlp_forward_2d.1} parent=1 // pred_check
      _
    $region19: #{_mlp_forward_2d.1} parent=1 // pred_check_branch
      %54 = sbr.rel (0) target = $region21
    $region20: #{_mlp_forward_2d.1} parent=1 // pred_region
      _
    $region21: #{_mlp_forward_2d.1} parent=1 // pred_fallthru
      _
    // Predicated region
    $region22: #{_mlp_forward_2d.1} parent=1 // pred_check
      _
    $region23: #{_mlp_forward_2d.1} parent=1 // pred_check_branch
      %56 = sbr.rel (0) target = $region25
    $region24: #{_mlp_forward_2d.1} parent=1 // pred_region
      _
    $region25: #{_mlp_forward_2d.1} parent=1 // pred_fallthru
      _
    // Predicated region
    $region26: #{_mlp_forward_2d.1} parent=1 // pred_check
      _
    $region27: #{_mlp_forward_2d.1} parent=1 // pred_check_branch
      %58 = sbr.rel (0) target = $region29
    $region28: #{_mlp_forward_2d.1} parent=1 // pred_region
      _
    $region29: #{_mlp_forward_2d.1} parent=1 // pred_fallthru
      _
    // Predicated region
    $region30: #{_mlp_forward_2d.1} parent=1 // pred_check
      _
    $region31: #{_mlp_forward_2d.1} parent=1 // pred_check_branch
      %60 = sbr.rel (0) target = $region33
    $region32: #{_mlp_forward_2d.1} parent=1 // pred_region
      %61 = dma.done [#allocation3], 1024
    $region33: #{_mlp_forward_2d.1} parent=1 // pred_fallthru
      _
    // Predicated region
    $region34: #{_mlp_forward_2d.1} parent=1 // pred_check
      _
    $region35: #{_mlp_forward_2d.1} parent=1 // pred_check_branch
      %63 = sbr.rel (0) target = $region37
    $region36: #{_mlp_forward_2d.1} parent=1 // pred_region
      %64 = dma.done [#allocation6], 1024
    $region37: #{_mlp_forward_2d.1} parent=1 // pred_fallthru
      _
    // Predicated region
    $region38: #{_mlp_forward_2d.1} parent=1 // pred_check
      _
    $region39: #{_mlp_forward_2d.1} parent=1 // pred_check_branch
      %66 = sbr.rel (0) target = $region41
    $region40: #{_mlp_forward_2d.1} parent=1 // pred_region
      %67 = dma.done [#allocation6], 1024
    $region41: #{_mlp_forward_2d.1} parent=1 // pred_fallthru
      _
    %v69 = vld [vmem:[%s0] sm:$0xf]
    %v70 = vld [vmem:[%s0 + $0x4] sm:$0xf]
    %v71 = vld [vmem:[#allocation2] sm:$0xf]
    %v72 = vld [vmem:[#allocation2 + $0x4] sm:$0xf]
    %v73 = vld [vmem:[#allocation2 + $0x8] sm:$0xf]
    %v74 = vld [vmem:[#allocation2 + $0xc] sm:$0xf]
    %v75 = vld [vmem:[#allocation2 + $0x10] sm:$0xf]
    %v76 = vld [vmem:[#allocation2 + $0x14] sm:$0xf]
    %v77 = vld [vmem:[#allocation2 + $0x18] sm:$0xf]
    %v78 = vld [vmem:[#allocation2 + $0x1c] sm:$0xf]
    %v79 = vld [vmem:[#allocation2 + $0x20] sm:$0xf]
    %v80 = vld [vmem:[#allocation2 + $0x24] sm:$0xf]
    %v81 = vld [vmem:[#allocation2 + $0x28] sm:$0xf]
    %v82 = vld [vmem:[#allocation2 + $0x2c] sm:$0xf]
    %v83 = vld [vmem:[#allocation2 + $0x30] sm:$0xf]
    %v84 = vld [vmem:[#allocation2 + $0x34] sm:$0xf]
    %v85 = vld [vmem:[#allocation2 + $0x38] sm:$0xf]
    %v86 = vld [vmem:[#allocation2 + $0x3c] sm:$0xf]
    %v87 = vld [vmem:[%s4] sm:$0x1]
    %v89 = vlaneseq
    %v90 = vshrl.u32 %v89, 7
    %v91 = vsub.s32 0, %v90
    %v92 = vrot.slane %v87, %v91
    %v96 = vunpack.c.l.b16 %v69
    %v97 = vunpack.c.l.b16 %v70
    %v98 = vpack.c.b16 %v97, %v96
    %v116 = vunpack.c.l.b16 %v71
    %v117 = vunpack.c.l.b16 %v72
    %v118 = vunpack.c.l.b16 %v73
    %v119 = vunpack.c.l.b16 %v74
    %v120 = vunpack.c.l.b16 %v75
    %v121 = vunpack.c.l.b16 %v76
    %v122 = vunpack.c.l.b16 %v77
    %v123 = vunpack.c.l.b16 %v78
    %v124 = vunpack.c.l.b16 %v79
    %v125 = vunpack.c.l.b16 %v80
    %v126 = vunpack.c.l.b16 %v81
    %v127 = vunpack.c.l.b16 %v82
    %v128 = vunpack.c.l.b16 %v83
    %v129 = vunpack.c.l.b16 %v84
    %v130 = vunpack.c.l.b16 %v85
    %v131 = vunpack.c.l.b16 %v86
    %v132 = vpack.c.b16 %v117, %v116
    %v133 = vpack.c.b16 %v119, %v118
    %v134 = vpack.c.b16 %v121, %v120
    %v135 = vpack.c.b16 %v123, %v122
    %v136 = vpack.c.b16 %v125, %v124
    %v137 = vpack.c.b16 %v127, %v126
    %v138 = vpack.c.b16 %v129, %v128
    %v139 = vpack.c.b16 %v131, %v130
    %148 = vmatprep.subr.bf16.mxu0 0
    %149 = vmatpush1.bf16.msra.mxu0 %v132
    %150 = vmatprep.subr.bf16.mxu0 0
    %151 = vmatpush1.bf16.msra.mxu0 %v133
    %152 = vmatprep.subr.bf16.mxu0 0
    %153 = vmatpush1.bf16.msra.mxu0 %v134
    %154 = vmatprep.subr.bf16.mxu0 0
    %155 = vmatpush1.bf16.msra.mxu0 %v135
    %156 = vmatprep.subr.bf16.mxu0 0
    %157 = vmatpush1.bf16.msra.mxu0 %v136
    %158 = vmatprep.subr.bf16.mxu0 0
    %159 = vmatpush1.bf16.msra.mxu0 %v137
    %160 = vmatprep.subr.bf16.mxu0 0
    %161 = vmatpush1.bf16.msra.mxu0 %v138
    %162 = vmatprep.subr.bf16.mxu0 0
    %163 = vmatpush1.bf16.msra.mxu0 %v139
    %164 = vmatprep.subr.bf16.mxu0 0
    %165 = vmatpush1.bf16.msra.mxu0 0
    %166 = vmatprep.subr.bf16.mxu0 0
    %167 = vmatpush1.bf16.msra.mxu0 0
    %168 = vmatprep.subr.bf16.mxu0 0
    %169 = vmatpush1.bf16.msra.mxu0 0
    %170 = vmatprep.subr.bf16.mxu0 0
    %171 = vmatpush1.bf16.msra.mxu0 0
    %172 = vmatprep.subr.bf16.mxu0 0
    %173 = vmatpush1.bf16.msra.mxu0 0
    %174 = vmatprep.subr.bf16.mxu0 0
    %175 = vmatpush1.bf16.msra.mxu0 0
    %176 = vmatprep.subr.bf16.mxu0 0
    %177 = vmatpush1.bf16.msra.mxu0 0
    %178 = vmatprep.subr.bf16.mxu0 0
    %179 = vmatpush1.bf16.msra.mxu0 0
    %180 = vmatprep.mubr.bf16.mxu0 0
    %181 = vmatmul.mubr.bf16.gmra.mrb[0].mxu0 %v98
    %v182 = vpop.f32.mrb[0].mxu0
    %v183 = vadd.f32 %v92, %v182
    %v184 = vpop.f32.mrb[0].mxu0
    %v185 = vpop.f32.mrb[0].mxu0
    %v186 = vadd.f32 %v92, %v185
    %v187 = vpop.f32.mrb[0].mxu0
    %188 = vdwg.mxu0
    %v189 = vmax.f32 %v183, 0.0
    %v190 = vmax.f32 %v186, 0.0
    %v191 = vpack.c.bf16 %v190, %v189
    %v192 = vld [vmem:[#allocation5] sm:$0xf]
    %v193 = vld [vmem:[#allocation5 + $0x4] sm:$0xf]
    %v194 = vld [vmem:[#allocation5 + $0x8] sm:$0xf]
    %v195 = vld [vmem:[#allocation5 + $0xc] sm:$0xf]
    %v196 = vld [vmem:[#allocation5 + $0x10] sm:$0xf]
    %v197 = vld [vmem:[#allocation5 + $0x14] sm:$0xf]
    %v198 = vld [vmem:[#allocation5 + $0x18] sm:$0xf]
    %v199 = vld [vmem:[#allocation5 + $0x1c] sm:$0xf]
    %v200 = vld [vmem:[#allocation5 + $0x20] sm:$0xf]
    %v201 = vld [vmem:[#allocation5 + $0x24] sm:$0xf]
    %v202 = vld [vmem:[#allocation5 + $0x28] sm:$0xf]
    %v203 = vld [vmem:[#allocation5 + $0x2c] sm:$0xf]
    %v204 = vld [vmem:[#allocation5 + $0x30] sm:$0xf]
    %v205 = vld [vmem:[#allocation5 + $0x34] sm:$0xf]
    %v206 = vld [vmem:[#allocation5 + $0x38] sm:$0xf]
    %v207 = vld [vmem:[#allocation5 + $0x3c] sm:$0xf]
    %v208 = vld [vmem:[%s5] sm:$0x1]
    %v210 = vlaneseq
    %v211 = vshrl.u32 %v210, 7
    %v212 = vsub.s32 0, %v211
    %v213 = vrot.slane %v208, %v212
    %v231 = vunpack.c.l.b16 %v192
    %v232 = vunpack.c.l.b16 %v193
    %v233 = vunpack.c.l.b16 %v194
    %v234 = vunpack.c.l.b16 %v195
    %v235 = vunpack.c.l.b16 %v196
    %v236 = vunpack.c.l.b16 %v197
    %v237 = vunpack.c.l.b16 %v198
    %v238 = vunpack.c.l.b16 %v199
    %v239 = vunpack.c.l.b16 %v200
    %v240 = vunpack.c.l.b16 %v201
    %v241 = vunpack.c.l.b16 %v202
    %v242 = vunpack.c.l.b16 %v203
    %v243 = vunpack.c.l.b16 %v204
    %v244 = vunpack.c.l.b16 %v205
    %v245 = vunpack.c.l.b16 %v206
    %v246 = vunpack.c.l.b16 %v207
    %v247 = vpack.c.b16 %v232, %v231
    %v248 = vpack.c.b16 %v234, %v233
    %v249 = vpack.c.b16 %v236, %v235
    %v250 = vpack.c.b16 %v238, %v237
    %v251 = vpack.c.b16 %v240, %v239
    %v252 = vpack.c.b16 %v242, %v241
    %v253 = vpack.c.b16 %v244, %v243
    %v254 = vpack.c.b16 %v246, %v245
    %263 = vmatprep.subr.bf16.mxu0 0
    %264 = vmatpush1.bf16.msra.mxu0 %v247
    %265 = vmatprep.subr.bf16.mxu0 0
    %266 = vmatpush1.bf16.msra.mxu0 %v248
    %267 = vmatprep.subr.bf16.mxu0 0
    %268 = vmatpush1.bf16.msra.mxu0 %v249
    %269 = vmatprep.subr.bf16.mxu0 0
    %270 = vmatpush1.bf16.msra.mxu0 %v250
    %271 = vmatprep.subr.bf16.mxu0 0
    %272 = vmatpush1.bf16.msra.mxu0 %v251
    %273 = vmatprep.subr.bf16.mxu0 0
    %274 = vmatpush1.bf16.msra.mxu0 %v252
    %275 = vmatprep.subr.bf16.mxu0 0
    %276 = vmatpush1.bf16.msra.mxu0 %v253
    %277 = vmatprep.subr.bf16.mxu0 0
    %278 = vmatpush1.bf16.msra.mxu0 %v254
    %279 = vmatprep.subr.bf16.mxu0 0
    %280 = vmatpush1.bf16.msra.mxu0 0
    %281 = vmatprep.subr.bf16.mxu0 0
    %282 = vmatpush1.bf16.msra.mxu0 0
    %283 = vmatprep.subr.bf16.mxu0 0
    %284 = vmatpush1.bf16.msra.mxu0 0
    %285 = vmatprep.subr.bf16.mxu0 0
    %286 = vmatpush1.bf16.msra.mxu0 0
    %287 = vmatprep.subr.bf16.mxu0 0
    %288 = vmatpush1.bf16.msra.mxu0 0
    %289 = vmatprep.subr.bf16.mxu0 0
    %290 = vmatpush1.bf16.msra.mxu0 0
    %291 = vmatprep.subr.bf16.mxu0 0
    %292 = vmatpush1.bf16.msra.mxu0 0
    %293 = vmatprep.subr.bf16.mxu0 0
    %294 = vmatpush1.bf16.msra.mxu0 0
    %295 = vmatprep.mubr.bf16.mxu0 0
    %296 = vmatmul.mubr.bf16.gmra.mrb[0].mxu0 %v191
    %v297 = vpop.f32.mrb[0].mxu0
    %v298 = vadd.f32 %v213, %v297
    %v299 = vpop.f32.mrb[0].mxu0
    %v300 = vpop.f32.mrb[0].mxu0
    %v301 = vadd.f32 %v213, %v300
    %v302 = vpop.f32.mrb[0].mxu0
    %303 = vdwg.mxu0
    %v304 = vmax.f32 %v298, 0.0
    %v305 = vmax.f32 %v301, 0.0
    %v306 = vpack.c.bf16 %v305, %v304
    %v307 = vld [vmem:[#allocation7] sm:$0xf]
    %v308 = vld [vmem:[#allocation7 + $0x4] sm:$0xf]
    %v309 = vld [vmem:[#allocation7 + $0x8] sm:$0xf]
    %v310 = vld [vmem:[#allocation7 + $0xc] sm:$0xf]
    %v311 = vld [vmem:[#allocation7 + $0x10] sm:$0xf]
    %v312 = vld [vmem:[#allocation7 + $0x14] sm:$0xf]
    %v313 = vld [vmem:[#allocation7 + $0x18] sm:$0xf]
    %v314 = vld [vmem:[#allocation7 + $0x1c] sm:$0xf]
    %v315 = vld [vmem:[#allocation7 + $0x20] sm:$0xf]
    %v316 = vld [vmem:[#allocation7 + $0x24] sm:$0xf]
    %v317 = vld [vmem:[#allocation7 + $0x28] sm:$0xf]
    %v318 = vld [vmem:[#allocation7 + $0x2c] sm:$0xf]
    %v319 = vld [vmem:[#allocation7 + $0x30] sm:$0xf]
    %v320 = vld [vmem:[#allocation7 + $0x34] sm:$0xf]
    %v321 = vld [vmem:[#allocation7 + $0x38] sm:$0xf]
    %v322 = vld [vmem:[#allocation7 + $0x3c] sm:$0xf]
    %v323 = vld [vmem:[%s6] sm:$0x1]
    %v325 = vlaneseq
    %v326 = vshrl.u32 %v325, 7
    %v327 = vsub.s32 0, %v326
    %v328 = vrot.slane %v323, %v327
    %v346 = vunpack.c.l.b16 %v307
    %v347 = vunpack.c.l.b16 %v308
    %v348 = vunpack.c.l.b16 %v309
    %v349 = vunpack.c.l.b16 %v310
    %v350 = vunpack.c.l.b16 %v311
    %v351 = vunpack.c.l.b16 %v312
    %v352 = vunpack.c.l.b16 %v313
    %v353 = vunpack.c.l.b16 %v314
    %v354 = vunpack.c.l.b16 %v315
    %v355 = vunpack.c.l.b16 %v316
    %v356 = vunpack.c.l.b16 %v317
    %v357 = vunpack.c.l.b16 %v318
    %v358 = vunpack.c.l.b16 %v319
    %v359 = vunpack.c.l.b16 %v320
    %v360 = vunpack.c.l.b16 %v321
    %v361 = vunpack.c.l.b16 %v322
    %v362 = vpack.c.b16 %v347, %v346
    %v363 = vpack.c.b16 %v349, %v348
    %v364 = vpack.c.b16 %v351, %v350
    %v365 = vpack.c.b16 %v353, %v352
    %v366 = vpack.c.b16 %v355, %v354
    %v367 = vpack.c.b16 %v357, %v356
    %v368 = vpack.c.b16 %v359, %v358
    %v369 = vpack.c.b16 %v361, %v360
    %378 = vmatprep.subr.bf16.mxu0 0
    %379 = vmatpush1.bf16.msra.mxu0 %v362
    %380 = vmatprep.subr.bf16.mxu0 0
    %381 = vmatpush1.bf16.msra.mxu0 %v363
    %382 = vmatprep.subr.bf16.mxu0 0
    %383 = vmatpush1.bf16.msra.mxu0 %v364
    %384 = vmatprep.subr.bf16.mxu0 0
    %385 = vmatpush1.bf16.msra.mxu0 %v365
    %386 = vmatprep.subr.bf16.mxu0 0
    %387 = vmatpush1.bf16.msra.mxu0 %v366
    %388 = vmatprep.subr.bf16.mxu0 0
    %389 = vmatpush1.bf16.msra.mxu0 %v367
    %390 = vmatprep.subr.bf16.mxu0 0
    %391 = vmatpush1.bf16.msra.mxu0 %v368
    %392 = vmatprep.subr.bf16.mxu0 0
    %393 = vmatpush1.bf16.msra.mxu0 %v369
    %394 = vmatprep.subr.bf16.mxu0 0
    %395 = vmatpush1.bf16.msra.mxu0 0
    %396 = vmatprep.subr.bf16.mxu0 0
    %397 = vmatpush1.bf16.msra.mxu0 0
    %398 = vmatprep.subr.bf16.mxu0 0
    %399 = vmatpush1.bf16.msra.mxu0 0
    %400 = vmatprep.subr.bf16.mxu0 0
    %401 = vmatpush1.bf16.msra.mxu0 0
    %402 = vmatprep.subr.bf16.mxu0 0
    %403 = vmatpush1.bf16.msra.mxu0 0
    %404 = vmatprep.subr.bf16.mxu0 0
    %405 = vmatpush1.bf16.msra.mxu0 0
    %406 = vmatprep.subr.bf16.mxu0 0
    %407 = vmatpush1.bf16.msra.mxu0 0
    %408 = vmatprep.subr.bf16.mxu0 0
    %409 = vmatpush1.bf16.msra.mxu0 0
    %410 = vmatprep.mubr.bf16.mxu0 0
    %411 = vmatmul.mubr.bf16.gmra.mrb[0].mxu0 %v306
    %v412 = vpop.f32.mrb[0].mxu0
    %v413 = vadd.f32 %v328, %v412
    %v414 = vpop.f32.mrb[0].mxu0
    %v415 = vpop.f32.mrb[0].mxu0
    %v416 = vadd.f32 %v328, %v415
    %v417 = vpop.f32.mrb[0].mxu0
    %418 = vdwg.mxu0
    %419 = vst [vmem:[#allocation8] sm:$0xff] %v413
    %420 = vst [vmem:[#allocation8 + $0x8] sm:$0xff] %v416
    // Predicated region
    $region42: #{_mlp_forward_2d.1} parent=1 // pred_check
      _
    $region43: #{_mlp_forward_2d.1} parent=1 // pred_check_branch
      %422 = sbr.rel (0) target = $region45
    $region44: #{_mlp_forward_2d.1} parent=1 // pred_region
      %s424 = ssub.s32 256, 256
      %425 = vsyncadd [#allocation4], %s424
      %s426 = sshll.u32 [#allocation8], 4
      %s427 = int_to_ptr.vmem [resolvable:$true] %s426
      %432 = dma.vmem_to_hbm [thread:$0]  %s427, 256, %s7, [#allocation4], 128, 128, 8
    $region45: #{_mlp_forward_2d.1} parent=1 // pred_fallthru
      _
    // Predicated region
    $region46: #{_mlp_forward_2d.1} parent=1 // pred_check
      _
    $region47: #{_mlp_forward_2d.1} parent=1 // pred_check_branch
      %434 = sbr.rel (0) target = $region49
    $region48: #{_mlp_forward_2d.1} parent=1 // pred_region
      %435 = dma.done [#allocation4], 256
    $region49: #{_mlp_forward_2d.1} parent=1 // pred_fallthru
      _
    %436 = vsyncpa [#allocation3], 1
    %437 = vsyncpa [#allocation6], 1
    %438 = vsyncpa [#allocation4], 1

</llo_original>
